<compile_context>
chip_gen: v5e
topology: v5e:2x2
jax: 0.10.0
libtpu: 0.0.40
codegen_flags: <defaults>
</compile_context>

<pallas_src>
import jax
import jax.numpy as jnp
from jax import lax
from jax.experimental import pallas as pl
from jax.experimental.pallas import tpu as pltpu  # noqa: F401


def _bilstm_kernel(x_ref, w_ref, whh_ref, h0_ref, c0_ref, cn_ref):
    """Fused forward+backward LSTM; writes the final cell state.

    x_ref  : (seq*2B, Kp)  block-diagonal stacked input (see module docstring)
    w_ref  : (Kp, 4H)      [W_ih_f^T ; W_ih_b^T ; b_f ; b_b ; zero-pad]
    whh_ref: (H, 8H)       [W_hh_f^T | W_hh_b^T]
    h0_ref : (2B, H)       rows 0:B fwd, B:2B bwd
    c0_ref : (2B, H)
    cn_ref : (2B, H)       output: final cell state (fwd rows, then bwd rows)
    """
    two_b, hidden = cn_ref.shape
    batch = two_b // 2
    h4 = 4 * hidden
    seq = x_ref.shape[0] // two_b

    # ---- (1) Hoisted input projection (+ bias, folded into the matmul) for
    # BOTH directions and ALL timesteps: one MXU pass outside the recurrence.
    xw = jnp.dot(x_ref[...], w_ref[...],
                 preferred_element_type=jnp.float32)            # (seq*2B, 4H)

    whh = whh_ref[...]                                          # (H, 8H)

    # Row selector: True on backward-direction rows.  Built once (hoisted).
    row_id = lax.broadcasted_iota(jnp.int32, (two_b, h4), 0)
    is_bwd = row_id >= batch                                    # (2B, 4H)

    h = h0_ref[...]                                             # (2B, H) vregs
    c = c0_ref[...]

    # ---- (2) Recurrence, fully unrolled (seq is small & static) so the LLO
    # scheduler can interleave MXU / EUP / VPU work across timesteps and the
    # carried state never round-trips through VMEM.
    for t in range(seq):
        gx = xw[t * two_b:(t + 1) * two_b, :]                   # aligned slice
        rec = jnp.dot(h, whh, preferred_element_type=jnp.float32)  # (2B, 8H)
        rec_sel = jnp.where(is_bwd, rec[:, h4:], rec[:, :h4])      # (2B, 4H)
        gates = gx + rec_sel

        sig = jax.nn.sigmoid(gates)        # one EUP pass over the full tile
        i = sig[:, 0 * hidden:1 * hidden]
        f = sig[:, 1 * hidden:2 * hidden]
        o = sig[:, 3 * hidden:4 * hidden]
        g = jnp.tanh(gates[:, 2 * hidden:3 * hidden])

        c = f * c + i * g
        h = o * jnp.tanh(c)

    cn_ref[...] = c


def bilstm_final_cell(x, h0, c0, w_ih, w_hh, b_ih, b_hh):
    """Bidirectional LSTM returning cn, shape (2, batch, hidden).

    x    : (batch, seq, embed)         -- batch_first, like nn.LSTM
    h0,c0: (2, batch, hidden)
    w_ih : (2, 4H, embed)   w_hh: (2, 4H, hidden)
    b_ih : (2, 4H)          b_hh: (2, 4H)
    """
    batch, seq, embed = x.shape
    hidden = w_hh.shape[-1]
    two_b = 2 * batch

    # ---- XLA-side layout work (all outside the kernel) --------------------
    # Stacked, time-reversal-baked-in, block-diagonal input with a ones
    # column per direction so the bias rides along in the matmul.
    x_tm = jnp.transpose(x, (1, 0, 2))                       # (seq, B, E)
    zpad = jnp.zeros_like(x_tm)
    one = jnp.ones((seq, batch, 1), x.dtype)
    zero = jnp.zeros((seq, batch, 1), x.dtype)
    fwd_rows = jnp.concatenate([x_tm, zpad, one, zero], axis=-1)
    bwd_rows = jnp.concatenate([zpad, x_tm[::-1], zero, one], axis=-1)
    x_stack = jnp.concatenate([fwd_rows, bwd_rows], axis=1)  # (seq, 2B, 2E+2)
    k_in = 2 * embed + 2

    # Matching block-diagonal weight with (b_ih + b_hh) folded in: (2E+2, 4H).
    w_cat = jnp.concatenate(
        [w_ih[0].T, w_ih[1].T,
         (b_ih[0] + b_hh[0])[None, :], (b_ih[1] + b_hh[1])[None, :]], axis=0)

    # Zero-pad the contraction dim to a sublane multiple (8) for clean tiling.
    k_pad = (-k_in) % 8
    if k_pad:
        x_stack = jnp.concatenate(
            [x_stack, jnp.zeros((seq, two_b, k_pad), x.dtype)], axis=-1)
        w_cat = jnp.concatenate(
            [w_cat, jnp.zeros((k_pad, 4 * hidden), w_cat.dtype)], axis=0)
    x_stack = x_stack.reshape(seq * two_b, k_in + k_pad)

    # Recurrent weights, lane-concatenated per direction: (H, 8H).
    whh_cat = jnp.concatenate([w_hh[0].T, w_hh[1].T], axis=1)

    h0_stack = h0.reshape(two_b, hidden)
    c0_stack = c0.reshape(two_b, hidden)

    cn2d = pl.pallas_call(
        _bilstm_kernel,
        out_shape=jax.ShapeDtypeStruct((two_b, hidden), jnp.float32),
    )(x_stack, w_cat, whh_cat, h0_stack, c0_stack)

    return cn2d.reshape(2, batch, hidden)


def _reference_bilstm_cn(x, h0, c0, w_ih, w_hh, b_ih, b_hh):
    """Pure-JAX reference (mirrors PyTorch nn.LSTM semantics)."""
    hidden = w_hh.shape[-1]

    def run_dir(xs, h, c, wih, whh, bi, bh):
        def step(carry, x_t):
            h, c = carry
            gates = x_t @ wih.T + h @ whh.T + bi + bh
            i = jax.nn.sigmoid(gates[:, 0 * hidden:1 * hidden])
            f = jax.nn.sigmoid(gates[:, 1 * hidden:2 * hidden])
            g = jnp.tanh(gates[:, 2 * hidden:3 * hidden])
            o = jax.nn.sigmoid(gates[:, 3 * hidden:4 * hidden])
            c = f * c + i * g
            h = o * jnp.tanh(c)
            return (h, c), None

        (h, c), _ = lax.scan(step, (h, c), xs)
        return c

    x_tm = jnp.transpose(x, (1, 0, 2))
    c_f = run_dir(x_tm, h0[0], c0[0], w_ih[0], w_hh[0], b_ih[0], b_hh[0])
    c_b = run_dir(x_tm[::-1], h0[1], c0[1], w_ih[1], w_hh[1], b_ih[1], b_hh[1])
    return jnp.stack([c_f, c_b], axis=0)


if __name__ == "__main__":
    # Small, forward-implied shapes: batch=4, seq=8, embedding_dim=16, hidden=32
    batch, seq, embedding_dim, hidden_dim = 4, 8, 16, 32

    key = jax.random.PRNGKey(0)
    kx, kwih, kwhh, kbih, kbhh = jax.random.split(key, 5)

    x = jax.random.normal(kx, (batch, seq, embedding_dim), dtype=jnp.float32)

    # PyTorch nn.LSTM default init: U(-1/sqrt(H), 1/sqrt(H)); deterministic here.
    bound = 1.0 / jnp.sqrt(jnp.float32(hidden_dim))
    w_ih = jax.random.uniform(kwih, (2, 4 * hidden_dim, embedding_dim),
                              minval=-bound, maxval=bound, dtype=jnp.float32)
    w_hh = jax.random.uniform(kwhh, (2, 4 * hidden_dim, hidden_dim),
                              minval=-bound, maxval=bound, dtype=jnp.float32)
    b_ih = jax.random.uniform(kbih, (2, 4 * hidden_dim),
                              minval=-bound, maxval=bound, dtype=jnp.float32)
    b_hh = jax.random.uniform(kbhh, (2, 4 * hidden_dim),
                              minval=-bound, maxval=bound, dtype=jnp.float32)

    # init_hidden(): zeros (2, batch, hidden) for both h0 and c0.
    h0 = jnp.zeros((2, batch, hidden_dim), dtype=jnp.float32)
    c0 = jnp.zeros((2, batch, hidden_dim), dtype=jnp.float32)

    cn = bilstm_final_cell(x, h0, c0, w_ih, w_hh, b_ih, b_hh)
    cn = jax.block_until_ready(cn)

    cn_ref = _reference_bilstm_cn(x, h0, c0, w_ih, w_hh, b_ih, b_hh)
    assert cn.shape == (2, batch, hidden_dim)
    assert jnp.allclose(cn, cn_ref, atol=2e-5, rtol=2e-5)

    print("KERNEL_OK")
</pallas_src>

<mosaic_0001>
module attributes {stable_mosaic.version = 11 : i64} {
  func.func @_bilstm_kernel(%arg0: memref<64x40xf32, #tpu.memory_space<vmem>>, %arg1: memref<40x128xf32, #tpu.memory_space<vmem>>, %arg2: memref<32x256xf32, #tpu.memory_space<vmem>>, %arg3: memref<8x32xf32, #tpu.memory_space<vmem>>, %arg4: memref<8x32xf32, #tpu.memory_space<vmem>>, %arg5: memref<8x32xf32, #tpu.memory_space<vmem>>) attributes {dimension_semantics = [], scalar_prefetch = 0 : i64, scratch_operands = 0 : i64, tpu.core_type = #tpu.core_type<tc>} {
    %c0 = arith.constant 0 : index
    %c0_0 = arith.constant 0 : index
    %0 = vector.load %arg0[%c0, %c0_0] : memref<64x40xf32, #tpu.memory_space<vmem>>, vector<64x40xf32>
    %c0_1 = arith.constant 0 : index
    %c0_2 = arith.constant 0 : index
    %1 = vector.load %arg1[%c0_1, %c0_2] : memref<40x128xf32, #tpu.memory_space<vmem>>, vector<40x128xf32>
    %cst = arith.constant dense<0.000000e+00> : vector<64x128xf32>
    %2 = tpu.matmul %0, %1, %cst {dimension_numbers = #tpu.dot_dimension_numbers<[1], [0], [0], [1], [0, 0, 1, 1], [], []>} : vector<64x40xf32>, vector<40x128xf32>, vector<64x128xf32> -> vector<64x128xf32>
    %c0_3 = arith.constant 0 : index
    %c0_4 = arith.constant 0 : index
    %3 = vector.load %arg2[%c0_3, %c0_4] : memref<32x256xf32, #tpu.memory_space<vmem>>, vector<32x256xf32>
    %4 = tpu.iota {dimensions = array<i32: 0>} : vector<8x128xi32>
    %c4_i32 = arith.constant 4 : i32
    %5 = vector.broadcast %c4_i32 : i32 to vector<8x128xi32>
    %6 = arith.cmpi sge, %4, %5 : vector<8x128xi32>
    %c0_5 = arith.constant 0 : index
    %c0_6 = arith.constant 0 : index
    %7 = vector.load %arg3[%c0_5, %c0_6] : memref<8x32xf32, #tpu.memory_space<vmem>>, vector<8x32xf32>
    %c0_7 = arith.constant 0 : index
    %c0_8 = arith.constant 0 : index
    %8 = vector.load %arg4[%c0_7, %c0_8] : memref<8x32xf32, #tpu.memory_space<vmem>>, vector<8x32xf32>
    %9 = vector.extract_strided_slice %2 {offsets = [0, 0], sizes = [8, 128], strides = [1, 1]} : vector<64x128xf32> to vector<8x128xf32>
    %cst_9 = arith.constant dense<0.000000e+00> : vector<8x256xf32>
    %10 = tpu.matmul %7, %3, %cst_9 {dimension_numbers = #tpu.dot_dimension_numbers<[1], [0], [0], [1], [0, 0, 1, 1], [], []>} : vector<8x32xf32>, vector<32x256xf32>, vector<8x256xf32> -> vector<8x256xf32>
    %11 = vector.extract_strided_slice %10 {offsets = [0, 128], sizes = [8, 128], strides = [1, 1]} : vector<8x256xf32> to vector<8x128xf32>
    %12 = vector.extract_strided_slice %10 {offsets = [0, 0], sizes = [8, 128], strides = [1, 1]} : vector<8x256xf32> to vector<8x128xf32>
    %13 = arith.select %6, %11, %12 : vector<8x128xi1>, vector<8x128xf32>
    %14 = arith.addf %9, %13 : vector<8x128xf32>
    %15 = arith.negf %14 : vector<8x128xf32>
    %16 = math.exp %15 : vector<8x128xf32>
    %cst_10 = arith.constant 1.000000e+00 : f32
    %17 = vector.broadcast %cst_10 : f32 to vector<8x128xf32>
    %18 = arith.addf %17, %16 : vector<8x128xf32>
    %19 = arith.divf %17, %18 : vector<8x128xf32>
    %20 = vector.extract_strided_slice %19 {offsets = [0, 0], sizes = [8, 32], strides = [1, 1]} : vector<8x128xf32> to vector<8x32xf32>
    %21 = vector.extract_strided_slice %19 {offsets = [0, 32], sizes = [8, 32], strides = [1, 1]} : vector<8x128xf32> to vector<8x32xf32>
    %22 = vector.extract_strided_slice %19 {offsets = [0, 96], sizes = [8, 32], strides = [1, 1]} : vector<8x128xf32> to vector<8x32xf32>
    %23 = vector.extract_strided_slice %14 {offsets = [0, 64], sizes = [8, 32], strides = [1, 1]} : vector<8x128xf32> to vector<8x32xf32>
    %24 = math.tanh %23 : vector<8x32xf32>
    %25 = arith.mulf %21, %8 : vector<8x32xf32>
    %26 = arith.mulf %20, %24 : vector<8x32xf32>
    %27 = arith.addf %25, %26 : vector<8x32xf32>
    %28 = math.tanh %27 : vector<8x32xf32>
    %29 = arith.mulf %22, %28 : vector<8x32xf32>
    %30 = vector.extract_strided_slice %2 {offsets = [8, 0], sizes = [8, 128], strides = [1, 1]} : vector<64x128xf32> to vector<8x128xf32>
    %cst_11 = arith.constant dense<0.000000e+00> : vector<8x256xf32>
    %31 = tpu.matmul %29, %3, %cst_11 {dimension_numbers = #tpu.dot_dimension_numbers<[1], [0], [0], [1], [0, 0, 1, 1], [], []>} : vector<8x32xf32>, vector<32x256xf32>, vector<8x256xf32> -> vector<8x256xf32>
    %32 = vector.extract_strided_slice %31 {offsets = [0, 128], sizes = [8, 128], strides = [1, 1]} : vector<8x256xf32> to vector<8x128xf32>
    %33 = vector.extract_strided_slice %31 {offsets = [0, 0], sizes = [8, 128], strides = [1, 1]} : vector<8x256xf32> to vector<8x128xf32>
    %34 = arith.select %6, %32, %33 : vector<8x128xi1>, vector<8x128xf32>
    %35 = arith.addf %30, %34 : vector<8x128xf32>
    %36 = arith.negf %35 : vector<8x128xf32>
    %37 = math.exp %36 : vector<8x128xf32>
    %cst_12 = arith.constant 1.000000e+00 : f32
    %38 = vector.broadcast %cst_12 : f32 to vector<8x128xf32>
    %39 = arith.addf %38, %37 : vector<8x128xf32>
    %40 = arith.divf %38, %39 : vector<8x128xf32>
    %41 = vector.extract_strided_slice %40 {offsets = [0, 0], sizes = [8, 32], strides = [1, 1]} : vector<8x128xf32> to vector<8x32xf32>
    %42 = vector.extract_strided_slice %40 {offsets = [0, 32], sizes = [8, 32], strides = [1, 1]} : vector<8x128xf32> to vector<8x32xf32>
    %43 = vector.extract_strided_slice %40 {offsets = [0, 96], sizes = [8, 32], strides = [1, 1]} : vector<8x128xf32> to vector<8x32xf32>
    %44 = vector.extract_strided_slice %35 {offsets = [0, 64], sizes = [8, 32], strides = [1, 1]} : vector<8x128xf32> to vector<8x32xf32>
    %45 = math.tanh %44 : vector<8x32xf32>
    %46 = arith.mulf %42, %27 : vector<8x32xf32>
    %47 = arith.mulf %41, %45 : vector<8x32xf32>
    %48 = arith.addf %46, %47 : vector<8x32xf32>
    %49 = math.tanh %48 : vector<8x32xf32>
    %50 = arith.mulf %43, %49 : vector<8x32xf32>
    %51 = vector.extract_strided_slice %2 {offsets = [16, 0], sizes = [8, 128], strides = [1, 1]} : vector<64x128xf32> to vector<8x128xf32>
    %cst_13 = arith.constant dense<0.000000e+00> : vector<8x256xf32>
    %52 = tpu.matmul %50, %3, %cst_13 {dimension_numbers = #tpu.dot_dimension_numbers<[1], [0], [0], [1], [0, 0, 1, 1], [], []>} : vector<8x32xf32>, vector<32x256xf32>, vector<8x256xf32> -> vector<8x256xf32>
    %53 = vector.extract_strided_slice %52 {offsets = [0, 128], sizes = [8, 128], strides = [1, 1]} : vector<8x256xf32> to vector<8x128xf32>
    %54 = vector.extract_strided_slice %52 {offsets = [0, 0], sizes = [8, 128], strides = [1, 1]} : vector<8x256xf32> to vector<8x128xf32>
    %55 = arith.select %6, %53, %54 : vector<8x128xi1>, vector<8x128xf32>
    %56 = arith.addf %51, %55 : vector<8x128xf32>
    %57 = arith.negf %56 : vector<8x128xf32>
    %58 = math.exp %57 : vector<8x128xf32>
    %cst_14 = arith.constant 1.000000e+00 : f32
    %59 = vector.broadcast %cst_14 : f32 to vector<8x128xf32>
    %60 = arith.addf %59, %58 : vector<8x128xf32>
    %61 = arith.divf %59, %60 : vector<8x128xf32>
    %62 = vector.extract_strided_slice %61 {offsets = [0, 0], sizes = [8, 32], strides = [1, 1]} : vector<8x128xf32> to vector<8x32xf32>
    %63 = vector.extract_strided_slice %61 {offsets = [0, 32], sizes = [8, 32], strides = [1, 1]} : vector<8x128xf32> to vector<8x32xf32>
    %64 = vector.extract_strided_slice %61 {offsets = [0, 96], sizes = [8, 32], strides = [1, 1]} : vector<8x128xf32> to vector<8x32xf32>
    %65 = vector.extract_strided_slice %56 {offsets = [0, 64], sizes = [8, 32], strides = [1, 1]} : vector<8x128xf32> to vector<8x32xf32>
    %66 = math.tanh %65 : vector<8x32xf32>
    %67 = arith.mulf %63, %48 : vector<8x32xf32>
    %68 = arith.mulf %62, %66 : vector<8x32xf32>
    %69 = arith.addf %67, %68 : vector<8x32xf32>
    %70 = math.tanh %69 : vector<8x32xf32>
    %71 = arith.mulf %64, %70 : vector<8x32xf32>
    %72 = vector.extract_strided_slice %2 {offsets = [24, 0], sizes = [8, 128], strides = [1, 1]} : vector<64x128xf32> to vector<8x128xf32>
    %cst_15 = arith.constant dense<0.000000e+00> : vector<8x256xf32>
    %73 = tpu.matmul %71, %3, %cst_15 {dimension_numbers = #tpu.dot_dimension_numbers<[1], [0], [0], [1], [0, 0, 1, 1], [], []>} : vector<8x32xf32>, vector<32x256xf32>, vector<8x256xf32> -> vector<8x256xf32>
    %74 = vector.extract_strided_slice %73 {offsets = [0, 128], sizes = [8, 128], strides = [1, 1]} : vector<8x256xf32> to vector<8x128xf32>
    %75 = vector.extract_strided_slice %73 {offsets = [0, 0], sizes = [8, 128], strides = [1, 1]} : vector<8x256xf32> to vector<8x128xf32>
    %76 = arith.select %6, %74, %75 : vector<8x128xi1>, vector<8x128xf32>
    %77 = arith.addf %72, %76 : vector<8x128xf32>
    %78 = arith.negf %77 : vector<8x128xf32>
    %79 = math.exp %78 : vector<8x128xf32>
    %cst_16 = arith.constant 1.000000e+00 : f32
    %80 = vector.broadcast %cst_16 : f32 to vector<8x128xf32>
    %81 = arith.addf %80, %79 : vector<8x128xf32>
    %82 = arith.divf %80, %81 : vector<8x128xf32>
    %83 = vector.extract_strided_slice %82 {offsets = [0, 0], sizes = [8, 32], strides = [1, 1]} : vector<8x128xf32> to vector<8x32xf32>
    %84 = vector.extract_strided_slice %82 {offsets = [0, 32], sizes = [8, 32], strides = [1, 1]} : vector<8x128xf32> to vector<8x32xf32>
    %85 = vector.extract_strided_slice %82 {offsets = [0, 96], sizes = [8, 32], strides = [1, 1]} : vector<8x128xf32> to vector<8x32xf32>
    %86 = vector.extract_strided_slice %77 {offsets = [0, 64], sizes = [8, 32], strides = [1, 1]} : vector<8x128xf32> to vector<8x32xf32>
    %87 = math.tanh %86 : vector<8x32xf32>
    %88 = arith.mulf %84, %69 : vector<8x32xf32>
    %89 = arith.mulf %83, %87 : vector<8x32xf32>
    %90 = arith.addf %88, %89 : vector<8x32xf32>
    %91 = math.tanh %90 : vector<8x32xf32>
    %92 = arith.mulf %85, %91 : vector<8x32xf32>
    %93 = vector.extract_strided_slice %2 {offsets = [32, 0], sizes = [8, 128], strides = [1, 1]} : vector<64x128xf32> to vector<8x128xf32>
    %cst_17 = arith.constant dense<0.000000e+00> : vector<8x256xf32>
    %94 = tpu.matmul %92, %3, %cst_17 {dimension_numbers = #tpu.dot_dimension_numbers<[1], [0], [0], [1], [0, 0, 1, 1], [], []>} : vector<8x32xf32>, vector<32x256xf32>, vector<8x256xf32> -> vector<8x256xf32>
    %95 = vector.extract_strided_slice %94 {offsets = [0, 128], sizes = [8, 128], strides = [1, 1]} : vector<8x256xf32> to vector<8x128xf32>
    %96 = vector.extract_strided_slice %94 {offsets = [0, 0], sizes = [8, 128], strides = [1, 1]} : vector<8x256xf32> to vector<8x128xf32>
    %97 = arith.select %6, %95, %96 : vector<8x128xi1>, vector<8x128xf32>
    %98 = arith.addf %93, %97 : vector<8x128xf32>
    %99 = arith.negf %98 : vector<8x128xf32>
    %100 = math.exp %99 : vector<8x128xf32>
    %cst_18 = arith.constant 1.000000e+00 : f32
    %101 = vector.broadcast %cst_18 : f32 to vector<8x128xf32>
    %102 = arith.addf %101, %100 : vector<8x128xf32>
    %103 = arith.divf %101, %102 : vector<8x128xf32>
    %104 = vector.extract_strided_slice %103 {offsets = [0, 0], sizes = [8, 32], strides = [1, 1]} : vector<8x128xf32> to vector<8x32xf32>
    %105 = vector.extract_strided_slice %103 {offsets = [0, 32], sizes = [8, 32], strides = [1, 1]} : vector<8x128xf32> to vector<8x32xf32>
    %106 = vector.extract_strided_slice %103 {offsets = [0, 96], sizes = [8, 32], strides = [1, 1]} : vector<8x128xf32> to vector<8x32xf32>
    %107 = vector.extract_strided_slice %98 {offsets = [0, 64], sizes = [8, 32], strides = [1, 1]} : vector<8x128xf32> to vector<8x32xf32>
    %108 = math.tanh %107 : vector<8x32xf32>
    %109 = arith.mulf %105, %90 : vector<8x32xf32>
    %110 = arith.mulf %104, %108 : vector<8x32xf32>
    %111 = arith.addf %109, %110 : vector<8x32xf32>
    %112 = math.tanh %111 : vector<8x32xf32>
    %113 = arith.mulf %106, %112 : vector<8x32xf32>
    %114 = vector.extract_strided_slice %2 {offsets = [40, 0], sizes = [8, 128], strides = [1, 1]} : vector<64x128xf32> to vector<8x128xf32>
    %cst_19 = arith.constant dense<0.000000e+00> : vector<8x256xf32>
    %115 = tpu.matmul %113, %3, %cst_19 {dimension_numbers = #tpu.dot_dimension_numbers<[1], [0], [0], [1], [0, 0, 1, 1], [], []>} : vector<8x32xf32>, vector<32x256xf32>, vector<8x256xf32> -> vector<8x256xf32>
    %116 = vector.extract_strided_slice %115 {offsets = [0, 128], sizes = [8, 128], strides = [1, 1]} : vector<8x256xf32> to vector<8x128xf32>
    %117 = vector.extract_strided_slice %115 {offsets = [0, 0], sizes = [8, 128], strides = [1, 1]} : vector<8x256xf32> to vector<8x128xf32>
    %118 = arith.select %6, %116, %117 : vector<8x128xi1>, vector<8x128xf32>
    %119 = arith.addf %114, %118 : vector<8x128xf32>
    %120 = arith.negf %119 : vector<8x128xf32>
    %121 = math.exp %120 : vector<8x128xf32>
    %cst_20 = arith.constant 1.000000e+00 : f32
    %122 = vector.broadcast %cst_20 : f32 to vector<8x128xf32>
    %123 = arith.addf %122, %121 : vector<8x128xf32>
    %124 = arith.divf %122, %123 : vector<8x128xf32>
    %125 = vector.extract_strided_slice %124 {offsets = [0, 0], sizes = [8, 32], strides = [1, 1]} : vector<8x128xf32> to vector<8x32xf32>
    %126 = vector.extract_strided_slice %124 {offsets = [0, 32], sizes = [8, 32], strides = [1, 1]} : vector<8x128xf32> to vector<8x32xf32>
    %127 = vector.extract_strided_slice %124 {offsets = [0, 96], sizes = [8, 32], strides = [1, 1]} : vector<8x128xf32> to vector<8x32xf32>
    %128 = vector.extract_strided_slice %119 {offsets = [0, 64], sizes = [8, 32], strides = [1, 1]} : vector<8x128xf32> to vector<8x32xf32>
    %129 = math.tanh %128 : vector<8x32xf32>
    %130 = arith.mulf %126, %111 : vector<8x32xf32>
    %131 = arith.mulf %125, %129 : vector<8x32xf32>
    %132 = arith.addf %130, %131 : vector<8x32xf32>
    %133 = math.tanh %132 : vector<8x32xf32>
    %134 = arith.mulf %127, %133 : vector<8x32xf32>
    %135 = vector.extract_strided_slice %2 {offsets = [48, 0], sizes = [8, 128], strides = [1, 1]} : vector<64x128xf32> to vector<8x128xf32>
    %cst_21 = arith.constant dense<0.000000e+00> : vector<8x256xf32>
    %136 = tpu.matmul %134, %3, %cst_21 {dimension_numbers = #tpu.dot_dimension_numbers<[1], [0], [0], [1], [0, 0, 1, 1], [], []>} : vector<8x32xf32>, vector<32x256xf32>, vector<8x256xf32> -> vector<8x256xf32>
    %137 = vector.extract_strided_slice %136 {offsets = [0, 128], sizes = [8, 128], strides = [1, 1]} : vector<8x256xf32> to vector<8x128xf32>
    %138 = vector.extract_strided_slice %136 {offsets = [0, 0], sizes = [8, 128], strides = [1, 1]} : vector<8x256xf32> to vector<8x128xf32>
    %139 = arith.select %6, %137, %138 : vector<8x128xi1>, vector<8x128xf32>
    %140 = arith.addf %135, %139 : vector<8x128xf32>
    %141 = arith.negf %140 : vector<8x128xf32>
    %142 = math.exp %141 : vector<8x128xf32>
    %cst_22 = arith.constant 1.000000e+00 : f32
    %143 = vector.broadcast %cst_22 : f32 to vector<8x128xf32>
    %144 = arith.addf %143, %142 : vector<8x128xf32>
    %145 = arith.divf %143, %144 : vector<8x128xf32>
    %146 = vector.extract_strided_slice %145 {offsets = [0, 0], sizes = [8, 32], strides = [1, 1]} : vector<8x128xf32> to vector<8x32xf32>
    %147 = vector.extract_strided_slice %145 {offsets = [0, 32], sizes = [8, 32], strides = [1, 1]} : vector<8x128xf32> to vector<8x32xf32>
    %148 = vector.extract_strided_slice %145 {offsets = [0, 96], sizes = [8, 32], strides = [1, 1]} : vector<8x128xf32> to vector<8x32xf32>
    %149 = vector.extract_strided_slice %140 {offsets = [0, 64], sizes = [8, 32], strides = [1, 1]} : vector<8x128xf32> to vector<8x32xf32>
    %150 = math.tanh %149 : vector<8x32xf32>
    %151 = arith.mulf %147, %132 : vector<8x32xf32>
    %152 = arith.mulf %146, %150 : vector<8x32xf32>
    %153 = arith.addf %151, %152 : vector<8x32xf32>
    %154 = math.tanh %153 : vector<8x32xf32>
    %155 = arith.mulf %148, %154 : vector<8x32xf32>
    %156 = vector.extract_strided_slice %2 {offsets = [56, 0], sizes = [8, 128], strides = [1, 1]} : vector<64x128xf32> to vector<8x128xf32>
    %cst_23 = arith.constant dense<0.000000e+00> : vector<8x256xf32>
    %157 = tpu.matmul %155, %3, %cst_23 {dimension_numbers = #tpu.dot_dimension_numbers<[1], [0], [0], [1], [0, 0, 1, 1], [], []>} : vector<8x32xf32>, vector<32x256xf32>, vector<8x256xf32> -> vector<8x256xf32>
    %158 = vector.extract_strided_slice %157 {offsets = [0, 128], sizes = [8, 128], strides = [1, 1]} : vector<8x256xf32> to vector<8x128xf32>
    %159 = vector.extract_strided_slice %157 {offsets = [0, 0], sizes = [8, 128], strides = [1, 1]} : vector<8x256xf32> to vector<8x128xf32>
    %160 = arith.select %6, %158, %159 : vector<8x128xi1>, vector<8x128xf32>
    %161 = arith.addf %156, %160 : vector<8x128xf32>
    %162 = arith.negf %161 : vector<8x128xf32>
    %163 = math.exp %162 : vector<8x128xf32>
    %cst_24 = arith.constant 1.000000e+00 : f32
    %164 = vector.broadcast %cst_24 : f32 to vector<8x128xf32>
    %165 = arith.addf %164, %163 : vector<8x128xf32>
    %166 = arith.divf %164, %165 : vector<8x128xf32>
    %167 = vector.extract_strided_slice %166 {offsets = [0, 0], sizes = [8, 32], strides = [1, 1]} : vector<8x128xf32> to vector<8x32xf32>
    %168 = vector.extract_strided_slice %166 {offsets = [0, 32], sizes = [8, 32], strides = [1, 1]} : vector<8x128xf32> to vector<8x32xf32>
    %169 = vector.extract_strided_slice %161 {offsets = [0, 64], sizes = [8, 32], strides = [1, 1]} : vector<8x128xf32> to vector<8x32xf32>
    %170 = math.tanh %169 : vector<8x32xf32>
    %171 = arith.mulf %168, %153 : vector<8x32xf32>
    %172 = arith.mulf %167, %170 : vector<8x32xf32>
    %173 = arith.addf %171, %172 : vector<8x32xf32>
    %c0_25 = arith.constant 0 : index
    %c0_26 = arith.constant 0 : index
    %174 = vector.load %arg5[%c0_25, %c0_26] : memref<8x32xf32, #tpu.memory_space<vmem>>, vector<8x32xf32>
    tpu.vector_store %arg5[%c0_25, %c0_26], %173 {strides = array<i32>} : memref<8x32xf32, #tpu.memory_space<vmem>>, vector<8x32xf32>,
    return
  }
}

</mosaic_0001>

<llo_original>
// kernel: tpu_custom_call.1
$region0: #{tpu_custom_call.1}
  #allocation0 [shape = 'u32[]', space=smem, size = 0x4, offset = 0x4, fixed_abs, tag = 'smem constant byte address 0x4 - core index']
  #allocation1 [shape = 'u32[72,128]{1,0:T(1,128)}', space=vmem, size = 0x9000, scoped, tag = 'internal scratch']
  %s0 = inlined_call_operand.vmem [shape: f32[64,40], index: 0, kind: input, shape index: {}]
  %s1 = inlined_call_operand.vmem [shape: f32[40,128], index: 1, kind: input, shape index: {}]
  %s2 = inlined_call_operand.vmem [shape: f32[32,256], index: 2, kind: input, shape index: {}]
  %s3 = inlined_call_operand.hbm [shape: f32[8,32], index: 3, kind: input, shape index: {}]
  %s4 = inlined_call_operand.hbm [shape: f32[8,32], index: 4, kind: input, shape index: {}]
  %s5 = inlined_call_operand.hbm [shape: f32[8,32], index: 5, kind: output, shape index: {}]
  %s6 = sld [smem:[#allocation0]]
  $region38: #{tpu_custom_call.1} parent=0
    _
  %s8 = ssub.s32 1, %s6
  %s9 = scalar_select 0, %s8, %s6
  $region1: #{tpu_custom_call.1} parent=0
    #allocation2 [shape = 'u8[4096]{0}', space=vmem, size = 0x1000, scoped, tag = 'input window, operand 3, single buffered']
    #allocation3 [shape = 's32[1]{0}', space=sflag, size = 0x4, scoped, tag = 'scoped memory for tpu_custom_call.1']
    #allocation4 [shape = 's32[1]{0}', space=sflag, size = 0x4, scoped, tag = 'scoped memory for tpu_custom_call.1']
    #allocation5 [shape = 'u8[4096]{0}', space=vmem, size = 0x1000, scoped, tag = 'input window, operand 4, single buffered']
    #allocation6 [shape = 's32[1]{0}', space=sflag, size = 0x4, scoped, tag = 'scoped memory for tpu_custom_call.1']
    #allocation7 [shape = 'u8[4096]{0}', space=vmem, size = 0x1000, scoped, tag = 'output window, operand 0, single buffered']
    %10 = vsyncpa [#allocation3], 0
    %11 = vsyncpa [#allocation6], 0
    %12 = vsyncpa [#allocation4], 0
    // Predicated region
    $region2: #{tpu_custom_call.1} parent=1 // pred_check
      _
    $region3: #{tpu_custom_call.1} parent=1 // pred_check_branch
      %14 = sbr.rel (0) target = $region5
    $region4: #{tpu_custom_call.1} parent=1 // pred_region
      _
    $region5: #{tpu_custom_call.1} parent=1 // pred_fallthru
      _
    // Predicated region
    $region6: #{tpu_custom_call.1} parent=1 // pred_check
      _
    $region7: #{tpu_custom_call.1} parent=1 // pred_check_branch
      %16 = sbr.rel (0) target = $region9
    $region8: #{tpu_custom_call.1} parent=1 // pred_region
      _
    $region9: #{tpu_custom_call.1} parent=1 // pred_fallthru
      _
    // Predicated region
    $region10: #{tpu_custom_call.1} parent=1 // pred_check
      _
    $region11: #{tpu_custom_call.1} parent=1 // pred_check_branch
      %18 = sbr.rel (0) target = $region13
    $region12: #{tpu_custom_call.1} parent=1 // pred_region
      _
    $region13: #{tpu_custom_call.1} parent=1 // pred_fallthru
      _
    // Predicated region
    $region14: #{tpu_custom_call.1} parent=1 // pred_check
      _
    $region15: #{tpu_custom_call.1} parent=1 // pred_check_branch
      %20 = sbr.rel (0) target = $region17
    $region16: #{tpu_custom_call.1} parent=1 // pred_region
      %22 = vsyncadd [#allocation3], 0
      %s24 = sshll.u32 %s3, 4
      %s25 = int_to_ptr.hbm [resolvable:$true] %s24
      %s26 = sshll.u32 [#allocation2], 4
      %s27 = int_to_ptr.vmem [resolvable:$true] %s26
      %29 = dma.hbm_to_vmem [thread:$0]  %s25, 128, %s27, [#allocation3]
    $region17: #{tpu_custom_call.1} parent=1 // pred_fallthru
      _
    // Predicated region
    $region18: #{tpu_custom_call.1} parent=1 // pred_check
      _
    $region19: #{tpu_custom_call.1} parent=1 // pred_check_branch
      %31 = sbr.rel (0) target = $region21
    $region20: #{tpu_custom_call.1} parent=1 // pred_region
      %33 = vsyncadd [#allocation6], 0
      %s35 = sshll.u32 %s4, 4
      %s36 = int_to_ptr.hbm [resolvable:$true] %s35
      %s37 = sshll.u32 [#allocation5], 4
      %s38 = int_to_ptr.vmem [resolvable:$true] %s37
      %40 = dma.hbm_to_vmem [thread:$0]  %s36, 128, %s38, [#allocation6]
    $region21: #{tpu_custom_call.1} parent=1 // pred_fallthru
      _
    // Predicated region
    $region22: #{tpu_custom_call.1} parent=1 // pred_check
      _
    $region23: #{tpu_custom_call.1} parent=1 // pred_check_branch
      %42 = sbr.rel (0) target = $region25
    $region24: #{tpu_custom_call.1} parent=1 // pred_region
      %44 = dma.done [#allocation3], 128
    $region25: #{tpu_custom_call.1} parent=1 // pred_fallthru
      _
    // Predicated region
    $region26: #{tpu_custom_call.1} parent=1 // pred_check
      _
    $region27: #{tpu_custom_call.1} parent=1 // pred_check_branch
      %46 = sbr.rel (0) target = $region29
    $region28: #{tpu_custom_call.1} parent=1 // pred_region
      %48 = dma.done [#allocation6], 128
    $region29: #{tpu_custom_call.1} parent=1 // pred_fallthru
      _
    %v49 = vld [vmem:[%s0] sm:$0xff]
    %v50 = vld [vmem:[%s0 + $0x8] sm:$0xff]
    %v51 = vld [vmem:[%s0 + $0x10] sm:$0xff]
    %v52 = vld [vmem:[%s0 + $0x18] sm:$0xff]
    %v53 = vld [vmem:[%s0 + $0x20] sm:$0xff]
    %v54 = vld [vmem:[%s0 + $0x28] sm:$0xff]
    %v55 = vld [vmem:[%s0 + $0x30] sm:$0xff]
    %v56 = vld [vmem:[%s0 + $0x38] sm:$0xff]
    %v57 = vld [vmem:[%s1] sm:$0xff]
    %v58 = vld [vmem:[%s1 + $0x8] sm:$0xff]
    %v59 = vld [vmem:[%s1 + $0x10] sm:$0xff]
    %v60 = vld [vmem:[%s1 + $0x18] sm:$0xff]
    %v61 = vld [vmem:[%s1 + $0x20] sm:$0xff]
    %vm62 = vcmask 326656
    %v64 = vsel %vm62, %v49, 0
    %v67 = vsel %vm62, %v50, 0
    %v70 = vsel %vm62, %v51, 0
    %v73 = vsel %vm62, %v52, 0
    %v76 = vsel %vm62, %v53, 0
    %v79 = vsel %vm62, %v54, 0
    %v82 = vsel %vm62, %v55, 0
    %v85 = vsel %vm62, %v56, 0
    %87 = vmatpush.msra.mxu0 0.0
    %88 = vmatpush.msra.mxu0 0.0
    %89 = vmatpush.msra.mxu0 0.0
    %90 = vmatpush.msra.mxu0 0.0
    %91 = vmatpush.msra.mxu0 0.0
    %92 = vmatpush.msra.mxu0 0.0
    %93 = vmatpush.msra.mxu0 0.0
    %94 = vmatpush.msra.mxu0 0.0
    %95 = vmatpush.msra.mxu0 0.0
    %96 = vmatpush.msra.mxu0 0.0
    %97 = vmatpush.msra.mxu0 0.0
    %98 = vmatpush.msra.mxu0 %v61
    %99 = vmatpush.msra.mxu0 %v60
    %100 = vmatpush.msra.mxu0 %v59
    %101 = vmatpush.msra.mxu0 %v58
    %102 = vmatpush.msra.mxu0 %v57
    %103 = vmatmul.f32.gmra.mxu0 %v64
    %v104 = vpop.f32.mrf.mxu0
    %v105 = vadd.f32 0.0, %v104
    %106 = vmatmul.f32.gmra.mxu0 %v67
    %v107 = vpop.f32.mrf.mxu0
    %v108 = vadd.f32 0.0, %v107
    %109 = vmatmul.f32.gmra.mxu0 %v70
    %v110 = vpop.f32.mrf.mxu0
    %v111 = vadd.f32 0.0, %v110
    %112 = vmatmul.f32.gmra.mxu0 %v73
    %v113 = vpop.f32.mrf.mxu0
    %v114 = vadd.f32 0.0, %v113
    %115 = vmatmul.f32.gmra.mxu0 %v76
    %v116 = vpop.f32.mrf.mxu0
    %v117 = vadd.f32 0.0, %v116
    %118 = vmatmul.f32.gmra.mxu0 %v79
    %v119 = vpop.f32.mrf.mxu0
    %v120 = vadd.f32 0.0, %v119
    %121 = vmatmul.f32.gmra.mxu0 %v82
    %v122 = vpop.f32.mrf.mxu0
    %v123 = vadd.f32 0.0, %v122
    %124 = vmatmul.f32.gmra.mxu0 %v85
    %v125 = vpop.f32.mrf.mxu0
    %v126 = vadd.f32 0.0, %v125
    %127 = vdwg.mxu0
    %v128 = vld [vmem:[%s2] sm:$0xff]
    %v129 = vld [vmem:[%s2 + $0x8] sm:$0xff]
    %v130 = vld [vmem:[%s2 + $0x10] sm:$0xff]
    %v131 = vld [vmem:[%s2 + $0x18] sm:$0xff]
    %v132 = vld [vmem:[%s2 + $0x20] sm:$0xff]
    %v133 = vld [vmem:[%s2 + $0x28] sm:$0xff]
    %v134 = vld [vmem:[%s2 + $0x30] sm:$0xff]
    %v135 = vld [vmem:[%s2 + $0x38] sm:$0xff]
    %v136 = vlaneseq
    %v137 = vshrl.u32 %v136, 7
    %vm138 = vcmp.ge.s32.totalorder %v137, 4
    %v139 = vld [vmem:[#allocation2] sm:$0xff]
    %v140 = vld [vmem:[#allocation5] sm:$0xff]
    %vm141 = vcmask 261120
    %v143 = vsel %vm141, %v139, 0
    %145 = vmatpush.msra.mxu0 0.0
    %146 = vmatpush.msra.mxu0 0.0
    %147 = vmatpush.msra.mxu0 0.0
    %148 = vmatpush.msra.mxu0 0.0
    %149 = vmatpush.msra.mxu0 0.0
    %150 = vmatpush.msra.mxu0 0.0
    %151 = vmatpush.msra.mxu0 0.0
    %152 = vmatpush.msra.mxu0 0.0
    %153 = vmatpush.msra.mxu0 0.0
    %154 = vmatpush.msra.mxu0 0.0
    %155 = vmatpush.msra.mxu0 0.0
    %156 = vmatpush.msra.mxu0 0.0
    %157 = vmatpush.msra.mxu0 %v134
    %158 = vmatpush.msra.mxu0 %v132
    %159 = vmatpush.msra.mxu0 %v130
    %160 = vmatpush.msra.mxu0 %v128
    %161 = vmatmul.f32.gmra.mxu0 %v143
    %v162 = vpop.f32.mrf.mxu0
    %v163 = vadd.f32 0.0, %v162
    %164 = vdwg.mxu0
    %165 = vmatpush.msra.mxu0 0.0
    %166 = vmatpush.msra.mxu0 0.0
    %167 = vmatpush.msra.mxu0 0.0
    %168 = vmatpush.msra.mxu0 0.0
    %169 = vmatpush.msra.mxu0 0.0
    %170 = vmatpush.msra.mxu0 0.0
    %171 = vmatpush.msra.mxu0 0.0
    %172 = vmatpush.msra.mxu0 0.0
    %173 = vmatpush.msra.mxu0 0.0
    %174 = vmatpush.msra.mxu0 0.0
    %175 = vmatpush.msra.mxu0 0.0
    %176 = vmatpush.msra.mxu0 0.0
    %177 = vmatpush.msra.mxu0 %v135
    %178 = vmatpush.msra.mxu0 %v133
    %179 = vmatpush.msra.mxu0 %v131
    %180 = vmatpush.msra.mxu0 %v129
    %181 = vmatmul.f32.gmra.mxu0 %v143
    %v182 = vpop.f32.mrf.mxu0
    %v183 = vadd.f32 0.0, %v182
    %184 = vdwg.mxu0
    %v185 = vsel %vm138, %v183, %v163
    %v186 = vadd.f32 %v105, %v185
    %v187 = vxor.u32 %v186, 2147483648
    %v188 = vmul.f32 %v187, 1.442695
    %v189 = vpow.pop %v188
    %v190 = vadd.f32 %v189, 1.0
    %v191 = vrcp.pop %v190
    %v192 = vmul.f32 %v190, %v191
    %v193 = vsub.f32 1.0, %v192
    %v194 = vmul.f32 %v191, %v193
    %v195 = vadd.f32 %v191, %v194
    %vm196 = vweird.f32 %v190
    %vm197 = vweird.f32 %v191
    %vm198 = vmor %vm196, %vm197
    %v199 = vsel %vm198, %v191, %v195
    %v200 = vand.u32 2147483647, %v190
    %vm201 = vcmp.eq.f32.partialorder %v200, 8.507059e+37
    %v202 = vand.u32 %v190, 2147483648
    %v203 = vor.u32 1.1754944e-38, %v202
    %v204 = vsel %vm201, %v203, %v199
    %v205 = vmul.f32 1.0, %v204
    %v206 = vtanh.pop %v186
    %208 = vrot.lane.b32.xlu0 %v140, 32
    %v209 = vpop.permute.xlu0 %208
    %v211 = vmul.f32 %v205, %v209
    %213 = vrot.lane.b32.xlu0 %v206, 64
    %v214 = vpop.permute.xlu0 %213
    %v216 = vmul.f32 %v205, %v214
    %218 = vrot.lane.b32.xlu0 %v216, 32
    %v219 = vpop.permute.xlu0 %218
    %v221 = vadd.f32 %v211, %v219
    %v222 = vtanh.pop %v221
    %224 = vrot.lane.b32.xlu0 %v222, 64
    %v225 = vpop.permute.xlu0 %224
    %v227 = vmul.f32 %v205, %v225
    %229 = vrot.lane.b32.xlu0 %v227, 32
    %v230 = vpop.permute.xlu0 %229
    %v231 = vsel %vm141, %v230, 0
    %233 = vmatpush.msra.mxu0 0.0
    %234 = vmatpush.msra.mxu0 0.0
    %235 = vmatpush.msra.mxu0 0.0
    %236 = vmatpush.msra.mxu0 0.0
    %237 = vmatpush.msra.mxu0 0.0
    %238 = vmatpush.msra.mxu0 0.0
    %239 = vmatpush.msra.mxu0 0.0
    %240 = vmatpush.msra.mxu0 0.0
    %241 = vmatpush.msra.mxu0 0.0
    %242 = vmatpush.msra.mxu0 0.0
    %243 = vmatpush.msra.mxu0 0.0
    %244 = vmatpush.msra.mxu0 0.0
    %245 = vmatpush.msra.mxu0 %v134
    %246 = vmatpush.msra.mxu0 %v132
    %247 = vmatpush.msra.mxu0 %v130
    %248 = vmatpush.msra.mxu0 %v128
    %249 = vmatmul.f32.gmra.mxu0 %v231
    %v250 = vpop.f32.mrf.mxu0
    %v251 = vadd.f32 0.0, %v250
    %252 = vdwg.mxu0
    %253 = vmatpush.msra.mxu0 0.0
    %254 = vmatpush.msra.mxu0 0.0
    %255 = vmatpush.msra.mxu0 0.0
    %256 = vmatpush.msra.mxu0 0.0
    %257 = vmatpush.msra.mxu0 0.0
    %258 = vmatpush.msra.mxu0 0.0
    %259 = vmatpush.msra.mxu0 0.0
    %260 = vmatpush.msra.mxu0 0.0
    %261 = vmatpush.msra.mxu0 0.0
    %262 = vmatpush.msra.mxu0 0.0
    %263 = vmatpush.msra.mxu0 0.0
    %264 = vmatpush.msra.mxu0 0.0
    %265 = vmatpush.msra.mxu0 %v135
    %266 = vmatpush.msra.mxu0 %v133
    %267 = vmatpush.msra.mxu0 %v131
    %268 = vmatpush.msra.mxu0 %v129
    %269 = vmatmul.f32.gmra.mxu0 %v231
    %v270 = vpop.f32.mrf.mxu0
    %v271 = vadd.f32 0.0, %v270
    %272 = vdwg.mxu0
    %v273 = vsel %vm138, %v271, %v251
    %v274 = vadd.f32 %v108, %v273
    %v275 = vxor.u32 %v274, 2147483648
    %v276 = vmul.f32 %v275, 1.442695
    %v277 = vpow.pop %v276
    %v278 = vadd.f32 %v277, 1.0
    %v279 = vrcp.pop %v278
    %v280 = vmul.f32 %v278, %v279
    %v281 = vsub.f32 1.0, %v280
    %v282 = vmul.f32 %v279, %v281
    %v283 = vadd.f32 %v279, %v282
    %vm284 = vweird.f32 %v278
    %vm285 = vweird.f32 %v279
    %vm286 = vmor %vm284, %vm285
    %v287 = vsel %vm286, %v279, %v283
    %v288 = vand.u32 2147483647, %v278
    %vm289 = vcmp.eq.f32.partialorder %v288, 8.507059e+37
    %v290 = vand.u32 %v278, 2147483648
    %v291 = vor.u32 1.1754944e-38, %v290
    %v292 = vsel %vm289, %v291, %v287
    %v293 = vmul.f32 1.0, %v292
    %v294 = vtanh.pop %v274
    %v295 = vmul.f32 %v293, %v221
    %297 = vrot.lane.b32.xlu0 %v294, 64
    %v298 = vpop.permute.xlu0 %297
    %v300 = vmul.f32 %v293, %v298
    %302 = vrot.lane.b32.xlu0 %v300, 32
    %v303 = vpop.permute.xlu0 %302
    %v305 = vadd.f32 %v295, %v303
    %v306 = vtanh.pop %v305
    %308 = vrot.lane.b32.xlu0 %v306, 64
    %v309 = vpop.permute.xlu0 %308
    %v311 = vmul.f32 %v293, %v309
    %313 = vrot.lane.b32.xlu0 %v311, 32
    %v314 = vpop.permute.xlu0 %313
    %v315 = vsel %vm141, %v314, 0
    %317 = vmatpush.msra.mxu0 0.0
    %318 = vmatpush.msra.mxu0 0.0
    %319 = vmatpush.msra.mxu0 0.0
    %320 = vmatpush.msra.mxu0 0.0
    %321 = vmatpush.msra.mxu0 0.0
    %322 = vmatpush.msra.mxu0 0.0
    %323 = vmatpush.msra.mxu0 0.0
    %324 = vmatpush.msra.mxu0 0.0
    %325 = vmatpush.msra.mxu0 0.0
    %326 = vmatpush.msra.mxu0 0.0
    %327 = vmatpush.msra.mxu0 0.0
    %328 = vmatpush.msra.mxu0 0.0
    %329 = vmatpush.msra.mxu0 %v134
    %330 = vmatpush.msra.mxu0 %v132
    %331 = vmatpush.msra.mxu0 %v130
    %332 = vmatpush.msra.mxu0 %v128
    %333 = vmatmul.f32.gmra.mxu0 %v315
    %v334 = vpop.f32.mrf.mxu0
    %v335 = vadd.f32 0.0, %v334
    %336 = vdwg.mxu0
    %337 = vmatpush.msra.mxu0 0.0
    %338 = vmatpush.msra.mxu0 0.0
    %339 = vmatpush.msra.mxu0 0.0
    %340 = vmatpush.msra.mxu0 0.0
    %341 = vmatpush.msra.mxu0 0.0
    %342 = vmatpush.msra.mxu0 0.0
    %343 = vmatpush.msra.mxu0 0.0
    %344 = vmatpush.msra.mxu0 0.0
    %345 = vmatpush.msra.mxu0 0.0
    %346 = vmatpush.msra.mxu0 0.0
    %347 = vmatpush.msra.mxu0 0.0
    %348 = vmatpush.msra.mxu0 0.0
    %349 = vmatpush.msra.mxu0 %v135
    %350 = vmatpush.msra.mxu0 %v133
    %351 = vmatpush.msra.mxu0 %v131
    %352 = vmatpush.msra.mxu0 %v129
    %353 = vmatmul.f32.gmra.mxu0 %v315
    %v354 = vpop.f32.mrf.mxu0
    %v355 = vadd.f32 0.0, %v354
    %356 = vdwg.mxu0
    %v357 = vsel %vm138, %v355, %v335
    %v358 = vadd.f32 %v111, %v357
    %v359 = vxor.u32 %v358, 2147483648
    %v360 = vmul.f32 %v359, 1.442695
    %v361 = vpow.pop %v360
    %v362 = vadd.f32 %v361, 1.0
    %v363 = vrcp.pop %v362
    %v364 = vmul.f32 %v362, %v363
    %v365 = vsub.f32 1.0, %v364
    %v366 = vmul.f32 %v363, %v365
    %v367 = vadd.f32 %v363, %v366
    %vm368 = vweird.f32 %v362
    %vm369 = vweird.f32 %v363
    %vm370 = vmor %vm368, %vm369
    %v371 = vsel %vm370, %v363, %v367
    %v372 = vand.u32 2147483647, %v362
    %vm373 = vcmp.eq.f32.partialorder %v372, 8.507059e+37
    %v374 = vand.u32 %v362, 2147483648
    %v375 = vor.u32 1.1754944e-38, %v374
    %v376 = vsel %vm373, %v375, %v371
    %v377 = vmul.f32 1.0, %v376
    %v378 = vtanh.pop %v358
    %v379 = vmul.f32 %v377, %v305
    %381 = vrot.lane.b32.xlu0 %v378, 64
    %v382 = vpop.permute.xlu0 %381
    %v384 = vmul.f32 %v377, %v382
    %386 = vrot.lane.b32.xlu0 %v384, 32
    %v387 = vpop.permute.xlu0 %386
    %v389 = vadd.f32 %v379, %v387
    %v390 = vtanh.pop %v389
    %392 = vrot.lane.b32.xlu0 %v390, 64
    %v393 = vpop.permute.xlu0 %392
    %v395 = vmul.f32 %v377, %v393
    %397 = vrot.lane.b32.xlu0 %v395, 32
    %v398 = vpop.permute.xlu0 %397
    %v399 = vsel %vm141, %v398, 0
    %401 = vmatpush.msra.mxu0 0.0
    %402 = vmatpush.msra.mxu0 0.0
    %403 = vmatpush.msra.mxu0 0.0
    %404 = vmatpush.msra.mxu0 0.0
    %405 = vmatpush.msra.mxu0 0.0
    %406 = vmatpush.msra.mxu0 0.0
    %407 = vmatpush.msra.mxu0 0.0
    %408 = vmatpush.msra.mxu0 0.0
    %409 = vmatpush.msra.mxu0 0.0
    %410 = vmatpush.msra.mxu0 0.0
    %411 = vmatpush.msra.mxu0 0.0
    %412 = vmatpush.msra.mxu0 0.0
    %413 = vmatpush.msra.mxu0 %v134
    %414 = vmatpush.msra.mxu0 %v132
    %415 = vmatpush.msra.mxu0 %v130
    %416 = vmatpush.msra.mxu0 %v128
    %417 = vmatmul.f32.gmra.mxu0 %v399
    %v418 = vpop.f32.mrf.mxu0
    %v419 = vadd.f32 0.0, %v418
    %420 = vdwg.mxu0
    %421 = vmatpush.msra.mxu0 0.0
    %422 = vmatpush.msra.mxu0 0.0
    %423 = vmatpush.msra.mxu0 0.0
    %424 = vmatpush.msra.mxu0 0.0
    %425 = vmatpush.msra.mxu0 0.0
    %426 = vmatpush.msra.mxu0 0.0
    %427 = vmatpush.msra.mxu0 0.0
    %428 = vmatpush.msra.mxu0 0.0
    %429 = vmatpush.msra.mxu0 0.0
    %430 = vmatpush.msra.mxu0 0.0
    %431 = vmatpush.msra.mxu0 0.0
    %432 = vmatpush.msra.mxu0 0.0
    %433 = vmatpush.msra.mxu0 %v135
    %434 = vmatpush.msra.mxu0 %v133
    %435 = vmatpush.msra.mxu0 %v131
    %436 = vmatpush.msra.mxu0 %v129
    %437 = vmatmul.f32.gmra.mxu0 %v399
    %v438 = vpop.f32.mrf.mxu0
    %v439 = vadd.f32 0.0, %v438
    %440 = vdwg.mxu0
    %v441 = vsel %vm138, %v439, %v419
    %v442 = vadd.f32 %v114, %v441
    %v443 = vxor.u32 %v442, 2147483648
    %v444 = vmul.f32 %v443, 1.442695
    %v445 = vpow.pop %v444
    %v446 = vadd.f32 %v445, 1.0
    %v447 = vrcp.pop %v446
    %v448 = vmul.f32 %v446, %v447
    %v449 = vsub.f32 1.0, %v448
    %v450 = vmul.f32 %v447, %v449
    %v451 = vadd.f32 %v447, %v450
    %vm452 = vweird.f32 %v446
    %vm453 = vweird.f32 %v447
    %vm454 = vmor %vm452, %vm453
    %v455 = vsel %vm454, %v447, %v451
    %v456 = vand.u32 2147483647, %v446
    %vm457 = vcmp.eq.f32.partialorder %v456, 8.507059e+37
    %v458 = vand.u32 %v446, 2147483648
    %v459 = vor.u32 1.1754944e-38, %v458
    %v460 = vsel %vm457, %v459, %v455
    %v461 = vmul.f32 1.0, %v460
    %v462 = vtanh.pop %v442
    %v463 = vmul.f32 %v461, %v389
    %465 = vrot.lane.b32.xlu0 %v462, 64
    %v466 = vpop.permute.xlu0 %465
    %v468 = vmul.f32 %v461, %v466
    %470 = vrot.lane.b32.xlu0 %v468, 32
    %v471 = vpop.permute.xlu0 %470
    %v473 = vadd.f32 %v463, %v471
    %v474 = vtanh.pop %v473
    %476 = vrot.lane.b32.xlu0 %v474, 64
    %v477 = vpop.permute.xlu0 %476
    %v479 = vmul.f32 %v461, %v477
    %481 = vrot.lane.b32.xlu0 %v479, 32
    %v482 = vpop.permute.xlu0 %481
    %v483 = vsel %vm141, %v482, 0
    %485 = vmatpush.msra.mxu0 0.0
    %486 = vmatpush.msra.mxu0 0.0
    %487 = vmatpush.msra.mxu0 0.0
    %488 = vmatpush.msra.mxu0 0.0
    %489 = vmatpush.msra.mxu0 0.0
    %490 = vmatpush.msra.mxu0 0.0
    %491 = vmatpush.msra.mxu0 0.0
    %492 = vmatpush.msra.mxu0 0.0
    %493 = vmatpush.msra.mxu0 0.0
    %494 = vmatpush.msra.mxu0 0.0
    %495 = vmatpush.msra.mxu0 0.0
    %496 = vmatpush.msra.mxu0 0.0
    %497 = vmatpush.msra.mxu0 %v134
    %498 = vmatpush.msra.mxu0 %v132
    %499 = vmatpush.msra.mxu0 %v130
    %500 = vmatpush.msra.mxu0 %v128
    %501 = vmatmul.f32.gmra.mxu0 %v483
    %v502 = vpop.f32.mrf.mxu0
    %v503 = vadd.f32 0.0, %v502
    %504 = vdwg.mxu0
    %505 = vmatpush.msra.mxu0 0.0
    %506 = vmatpush.msra.mxu0 0.0
    %507 = vmatpush.msra.mxu0 0.0
    %508 = vmatpush.msra.mxu0 0.0
    %509 = vmatpush.msra.mxu0 0.0
    %510 = vmatpush.msra.mxu0 0.0
    %511 = vmatpush.msra.mxu0 0.0
    %512 = vmatpush.msra.mxu0 0.0
    %513 = vmatpush.msra.mxu0 0.0
    %514 = vmatpush.msra.mxu0 0.0
    %515 = vmatpush.msra.mxu0 0.0
    %516 = vmatpush.msra.mxu0 0.0
    %517 = vmatpush.msra.mxu0 %v135
    %518 = vmatpush.msra.mxu0 %v133
    %519 = vmatpush.msra.mxu0 %v131
    %520 = vmatpush.msra.mxu0 %v129
    %521 = vmatmul.f32.gmra.mxu0 %v483
    %v522 = vpop.f32.mrf.mxu0
    %v523 = vadd.f32 0.0, %v522
    %524 = vdwg.mxu0
    %v525 = vsel %vm138, %v523, %v503
    %v526 = vadd.f32 %v117, %v525
    %v527 = vxor.u32 %v526, 2147483648
    %v528 = vmul.f32 %v527, 1.442695
    %v529 = vpow.pop %v528
    %v530 = vadd.f32 %v529, 1.0
    %v531 = vrcp.pop %v530
    %v532 = vmul.f32 %v530, %v531
    %v533 = vsub.f32 1.0, %v532
    %v534 = vmul.f32 %v531, %v533
    %v535 = vadd.f32 %v531, %v534
    %vm536 = vweird.f32 %v530
    %vm537 = vweird.f32 %v531
    %vm538 = vmor %vm536, %vm537
    %v539 = vsel %vm538, %v531, %v535
    %v540 = vand.u32 2147483647, %v530
    %vm541 = vcmp.eq.f32.partialorder %v540, 8.507059e+37
    %v542 = vand.u32 %v530, 2147483648
    %v543 = vor.u32 1.1754944e-38, %v542
    %v544 = vsel %vm541, %v543, %v539
    %v545 = vmul.f32 1.0, %v544
    %v546 = vtanh.pop %v526
    %v547 = vmul.f32 %v545, %v473
    %549 = vrot.lane.b32.xlu0 %v546, 64
    %v550 = vpop.permute.xlu0 %549
    %v552 = vmul.f32 %v545, %v550
    %554 = vrot.lane.b32.xlu0 %v552, 32
    %v555 = vpop.permute.xlu0 %554
    %v557 = vadd.f32 %v547, %v555
    %v558 = vtanh.pop %v557
    %560 = vrot.lane.b32.xlu0 %v558, 64
    %v561 = vpop.permute.xlu0 %560
    %v563 = vmul.f32 %v545, %v561
    %565 = vrot.lane.b32.xlu0 %v563, 32
    %v566 = vpop.permute.xlu0 %565
    %v567 = vsel %vm141, %v566, 0
    %569 = vmatpush.msra.mxu0 0.0
    %570 = vmatpush.msra.mxu0 0.0
    %571 = vmatpush.msra.mxu0 0.0
    %572 = vmatpush.msra.mxu0 0.0
    %573 = vmatpush.msra.mxu0 0.0
    %574 = vmatpush.msra.mxu0 0.0
    %575 = vmatpush.msra.mxu0 0.0
    %576 = vmatpush.msra.mxu0 0.0
    %577 = vmatpush.msra.mxu0 0.0
    %578 = vmatpush.msra.mxu0 0.0
    %579 = vmatpush.msra.mxu0 0.0
    %580 = vmatpush.msra.mxu0 0.0
    %581 = vmatpush.msra.mxu0 %v134
    %582 = vmatpush.msra.mxu0 %v132
    %583 = vmatpush.msra.mxu0 %v130
    %584 = vmatpush.msra.mxu0 %v128
    %585 = vmatmul.f32.gmra.mxu0 %v567
    %v586 = vpop.f32.mrf.mxu0
    %v587 = vadd.f32 0.0, %v586
    %588 = vdwg.mxu0
    %589 = vmatpush.msra.mxu0 0.0
    %590 = vmatpush.msra.mxu0 0.0
    %591 = vmatpush.msra.mxu0 0.0
    %592 = vmatpush.msra.mxu0 0.0
    %593 = vmatpush.msra.mxu0 0.0
    %594 = vmatpush.msra.mxu0 0.0
    %595 = vmatpush.msra.mxu0 0.0
    %596 = vmatpush.msra.mxu0 0.0
    %597 = vmatpush.msra.mxu0 0.0
    %598 = vmatpush.msra.mxu0 0.0
    %599 = vmatpush.msra.mxu0 0.0
    %600 = vmatpush.msra.mxu0 0.0
    %601 = vmatpush.msra.mxu0 %v135
    %602 = vmatpush.msra.mxu0 %v133
    %603 = vmatpush.msra.mxu0 %v131
    %604 = vmatpush.msra.mxu0 %v129
    %605 = vmatmul.f32.gmra.mxu0 %v567
    %v606 = vpop.f32.mrf.mxu0
    %v607 = vadd.f32 0.0, %v606
    %608 = vdwg.mxu0
    %v609 = vsel %vm138, %v607, %v587
    %v610 = vadd.f32 %v120, %v609
    %v611 = vxor.u32 %v610, 2147483648
    %v612 = vmul.f32 %v611, 1.442695
    %v613 = vpow.pop %v612
    %v614 = vadd.f32 %v613, 1.0
    %v615 = vrcp.pop %v614
    %v616 = vmul.f32 %v614, %v615
    %v617 = vsub.f32 1.0, %v616
    %v618 = vmul.f32 %v615, %v617
    %v619 = vadd.f32 %v615, %v618
    %vm620 = vweird.f32 %v614
    %vm621 = vweird.f32 %v615
    %vm622 = vmor %vm620, %vm621
    %v623 = vsel %vm622, %v615, %v619
    %v624 = vand.u32 2147483647, %v614
    %vm625 = vcmp.eq.f32.partialorder %v624, 8.507059e+37
    %v626 = vand.u32 %v614, 2147483648
    %v627 = vor.u32 1.1754944e-38, %v626
    %v628 = vsel %vm625, %v627, %v623
    %v629 = vmul.f32 1.0, %v628
    %v630 = vtanh.pop %v610
    %v631 = vmul.f32 %v629, %v557
    %633 = vrot.lane.b32.xlu0 %v630, 64
    %v634 = vpop.permute.xlu0 %633
    %v636 = vmul.f32 %v629, %v634
    %638 = vrot.lane.b32.xlu0 %v636, 32
    %v639 = vpop.permute.xlu0 %638
    %v641 = vadd.f32 %v631, %v639
    %v642 = vtanh.pop %v641
    %644 = vrot.lane.b32.xlu0 %v642, 64
    %v645 = vpop.permute.xlu0 %644
    %v647 = vmul.f32 %v629, %v645
    %649 = vrot.lane.b32.xlu0 %v647, 32
    %v650 = vpop.permute.xlu0 %649
    %v651 = vsel %vm141, %v650, 0
    %653 = vmatpush.msra.mxu0 0.0
    %654 = vmatpush.msra.mxu0 0.0
    %655 = vmatpush.msra.mxu0 0.0
    %656 = vmatpush.msra.mxu0 0.0
    %657 = vmatpush.msra.mxu0 0.0
    %658 = vmatpush.msra.mxu0 0.0
    %659 = vmatpush.msra.mxu0 0.0
    %660 = vmatpush.msra.mxu0 0.0
    %661 = vmatpush.msra.mxu0 0.0
    %662 = vmatpush.msra.mxu0 0.0
    %663 = vmatpush.msra.mxu0 0.0
    %664 = vmatpush.msra.mxu0 0.0
    %665 = vmatpush.msra.mxu0 %v134
    %666 = vmatpush.msra.mxu0 %v132
    %667 = vmatpush.msra.mxu0 %v130
    %668 = vmatpush.msra.mxu0 %v128
    %669 = vmatmul.f32.gmra.mxu0 %v651
    %v670 = vpop.f32.mrf.mxu0
    %v671 = vadd.f32 0.0, %v670
    %672 = vdwg.mxu0
    %673 = vmatpush.msra.mxu0 0.0
    %674 = vmatpush.msra.mxu0 0.0
    %675 = vmatpush.msra.mxu0 0.0
    %676 = vmatpush.msra.mxu0 0.0
    %677 = vmatpush.msra.mxu0 0.0
    %678 = vmatpush.msra.mxu0 0.0
    %679 = vmatpush.msra.mxu0 0.0
    %680 = vmatpush.msra.mxu0 0.0
    %681 = vmatpush.msra.mxu0 0.0
    %682 = vmatpush.msra.mxu0 0.0
    %683 = vmatpush.msra.mxu0 0.0
    %684 = vmatpush.msra.mxu0 0.0
    %685 = vmatpush.msra.mxu0 %v135
    %686 = vmatpush.msra.mxu0 %v133
    %687 = vmatpush.msra.mxu0 %v131
    %688 = vmatpush.msra.mxu0 %v129
    %689 = vmatmul.f32.gmra.mxu0 %v651
    %v690 = vpop.f32.mrf.mxu0
    %v691 = vadd.f32 0.0, %v690
    %692 = vdwg.mxu0
    %v693 = vsel %vm138, %v691, %v671
    %v694 = vadd.f32 %v123, %v693
    %v695 = vxor.u32 %v694, 2147483648
    %v696 = vmul.f32 %v695, 1.442695
    %v697 = vpow.pop %v696
    %v698 = vadd.f32 %v697, 1.0
    %v699 = vrcp.pop %v698
    %v700 = vmul.f32 %v698, %v699
    %v701 = vsub.f32 1.0, %v700
    %v702 = vmul.f32 %v699, %v701
    %v703 = vadd.f32 %v699, %v702
    %vm704 = vweird.f32 %v698
    %vm705 = vweird.f32 %v699
    %vm706 = vmor %vm704, %vm705
    %v707 = vsel %vm706, %v699, %v703
    %v708 = vand.u32 2147483647, %v698
    %vm709 = vcmp.eq.f32.partialorder %v708, 8.507059e+37
    %v710 = vand.u32 %v698, 2147483648
    %v711 = vor.u32 1.1754944e-38, %v710
    %v712 = vsel %vm709, %v711, %v707
    %v713 = vmul.f32 1.0, %v712
    %v714 = vtanh.pop %v694
    %v715 = vmul.f32 %v713, %v641
    %717 = vrot.lane.b32.xlu0 %v714, 64
    %v718 = vpop.permute.xlu0 %717
    %v720 = vmul.f32 %v713, %v718
    %722 = vrot.lane.b32.xlu0 %v720, 32
    %v723 = vpop.permute.xlu0 %722
    %v725 = vadd.f32 %v715, %v723
    %v726 = vtanh.pop %v725
    %728 = vrot.lane.b32.xlu0 %v726, 64
    %v729 = vpop.permute.xlu0 %728
    %v731 = vmul.f32 %v713, %v729
    %733 = vrot.lane.b32.xlu0 %v731, 32
    %v734 = vpop.permute.xlu0 %733
    %v735 = vsel %vm141, %v734, 0
    %737 = vmatpush.msra.mxu0 0.0
    %738 = vmatpush.msra.mxu0 0.0
    %739 = vmatpush.msra.mxu0 0.0
    %740 = vmatpush.msra.mxu0 0.0
    %741 = vmatpush.msra.mxu0 0.0
    %742 = vmatpush.msra.mxu0 0.0
    %743 = vmatpush.msra.mxu0 0.0
    %744 = vmatpush.msra.mxu0 0.0
    %745 = vmatpush.msra.mxu0 0.0
    %746 = vmatpush.msra.mxu0 0.0
    %747 = vmatpush.msra.mxu0 0.0
    %748 = vmatpush.msra.mxu0 0.0
    %749 = vmatpush.msra.mxu0 %v134
    %750 = vmatpush.msra.mxu0 %v132
    %751 = vmatpush.msra.mxu0 %v130
    %752 = vmatpush.msra.mxu0 %v128
    %753 = vmatmul.f32.gmra.mxu0 %v735
    %v754 = vpop.f32.mrf.mxu0
    %v755 = vadd.f32 0.0, %v754
    %756 = vdwg.mxu0
    %757 = vmatpush.msra.mxu0 0.0
    %758 = vmatpush.msra.mxu0 0.0
    %759 = vmatpush.msra.mxu0 0.0
    %760 = vmatpush.msra.mxu0 0.0
    %761 = vmatpush.msra.mxu0 0.0
    %762 = vmatpush.msra.mxu0 0.0
    %763 = vmatpush.msra.mxu0 0.0
    %764 = vmatpush.msra.mxu0 0.0
    %765 = vmatpush.msra.mxu0 0.0
    %766 = vmatpush.msra.mxu0 0.0
    %767 = vmatpush.msra.mxu0 0.0
    %768 = vmatpush.msra.mxu0 0.0
    %769 = vmatpush.msra.mxu0 %v135
    %770 = vmatpush.msra.mxu0 %v133
    %771 = vmatpush.msra.mxu0 %v131
    %772 = vmatpush.msra.mxu0 %v129
    %773 = vmatmul.f32.gmra.mxu0 %v735
    %v774 = vpop.f32.mrf.mxu0
    %v775 = vadd.f32 0.0, %v774
    %776 = vdwg.mxu0
    %v777 = vsel %vm138, %v775, %v755
    %v778 = vadd.f32 %v126, %v777
    %v779 = vxor.u32 %v778, 2147483648
    %v780 = vmul.f32 %v779, 1.442695
    %v781 = vpow.pop %v780
    %v782 = vadd.f32 %v781, 1.0
    %v783 = vrcp.pop %v782
    %v784 = vmul.f32 %v782, %v783
    %v785 = vsub.f32 1.0, %v784
    %v786 = vmul.f32 %v783, %v785
    %v787 = vadd.f32 %v783, %v786
    %vm788 = vweird.f32 %v782
    %vm789 = vweird.f32 %v783
    %vm790 = vmor %vm788, %vm789
    %v791 = vsel %vm790, %v783, %v787
    %v792 = vand.u32 2147483647, %v782
    %vm793 = vcmp.eq.f32.partialorder %v792, 8.507059e+37
    %v794 = vand.u32 %v782, 2147483648
    %v795 = vor.u32 1.1754944e-38, %v794
    %v796 = vsel %vm793, %v795, %v791
    %v797 = vmul.f32 1.0, %v796
    %v798 = vtanh.pop %v778
    %v799 = vmul.f32 %v797, %v725
    %801 = vrot.lane.b32.xlu0 %v798, 64
    %v802 = vpop.permute.xlu0 %801
    %v804 = vmul.f32 %v797, %v802
    %806 = vrot.lane.b32.xlu0 %v804, 32
    %v807 = vpop.permute.xlu0 %806
    %v809 = vadd.f32 %v799, %v807
    %811 = vrot.lane.b32.xlu0 %v809, 96
    %v812 = vpop.permute.xlu0 %811
    %814 = vst.msk [vmem:[#allocation7] sm:$0xff] %vm141, %v812
    // Predicated region
    $region30: #{tpu_custom_call.1} parent=1 // pred_check
      _
    $region31: #{tpu_custom_call.1} parent=1 // pred_check_branch
      %816 = sbr.rel (0) target = $region33
    $region32: #{tpu_custom_call.1} parent=1 // pred_region
      %818 = vsyncadd [#allocation4], 0
      %s820 = sshll.u32 [#allocation7], 4
      %s821 = int_to_ptr.vmem [resolvable:$true] %s820
      %s822 = sshll.u32 %s5, 4
      %s823 = int_to_ptr.hbm [resolvable:$true] %s822
      %825 = dma.vmem_to_hbm [thread:$0]  %s821, 128, %s823, [#allocation4]
    $region33: #{tpu_custom_call.1} parent=1 // pred_fallthru
      _
    // Predicated region
    $region34: #{tpu_custom_call.1} parent=1 // pred_check
      _
    $region35: #{tpu_custom_call.1} parent=1 // pred_check_branch
      %827 = sbr.rel (0) target = $region37
    $region36: #{tpu_custom_call.1} parent=1 // pred_region
      %829 = dma.done [#allocation4], 128
    $region37: #{tpu_custom_call.1} parent=1 // pred_fallthru
      _
    %830 = vsyncpa [#allocation3], 1
    %831 = vsyncpa [#allocation6], 1
    %832 = vsyncpa [#allocation4], 1

</llo_original>
